<compile_context>
chip_gen: v7x
topology: tpu7x:2x2x1
jax: 0.10.0
libtpu: 0.0.40
codegen_flags: <defaults>
</compile_context>

<pallas_src>
import functools
import math

import jax
import jax.numpy as jnp
from jax.experimental import pallas as pl
from jax.experimental.pallas import tpu as pltpu

_LANE = 128
_TARGET_TILE_BYTES = 2 * 1024 * 1024   # per-buffer sweet spot (~85%+ of HBM roofline)
_MAX_ROW_TILE_BYTES = 8 * 1024 * 1024  # single-row budget for the flat lane layout
_MAX_UNROLL_GROUPS = 64                # static per-kernel channel-group unroll cap


def _round_up(a, m):
    return ((a + m - 1) // m) * m


def _sublane_tile(dtype):
    # Native sublane tile: 8 rows for f32, 16 for bf16, 32 for int8/fp8.
    return max(1, 32 // jnp.dtype(dtype).itemsize)


@functools.lru_cache(maxsize=1)
def _num_tensorcores():
    """Best-effort TensorCores per device (megacore chips such as v4/v5p/v7x -> 2)."""
    try:
        dev = jax.devices()[0]
        n = getattr(dev, "num_cores", None)
        if isinstance(n, int) and n > 0:
            return n
        kind = str(getattr(dev, "device_kind", "")).lower()
        if any(t in kind for t in ("v2", "v3", "lite", "v5e", "v6e")):
            return 1
        return 2
    except Exception:
        return 1


def _qparams(mantissa, exponent):
    return dict(
        min_e=float(-(2 ** (exponent - 1))),
        max_e=float(2 ** (exponent - 1) - 1),
        mts=float(mantissa),
        min_m=float(-(2 ** mantissa) + 1),
        max_m=float(2 ** mantissa - 1),
    )


def _shared_scales(block_max, *, min_e, max_e, mts):
    # floor(clip(log2(max|x|))) == max(floor(clip(log2|x|))): monotone, so one log2 on
    # the reduced slab only.  Both factors are exact powers of two, so multiplying by
    # the inverse replaces the reference's full-tile divide.
    max_log = jnp.floor(jnp.clip(jnp.log2(block_max), min_e, max_e))
    scale = jnp.exp2(mts - 1.0 - max_log)
    inv_scale = jnp.exp2(max_log + 1.0 - mts)
    return scale, inv_scale


def _bfp_lane_kernel(x_ref, o_ref, *, group_sizes, hw,
                     min_e, max_e, mts, min_m, max_m):
    """x_ref/o_ref: (tb, L) with L = sum(group_sizes) * hw and hw % 128 == 0.

    Channel k of channel-group g lives in the 128-aligned lane window
    [(off_g + k) * hw, (off_g + k + 1) * hw): all slices select whole vregs, there is
    no sublane padding, and the shared scale is reused per chunk (no broadcast needed).
    """
    col = 0
    for gsz in group_sizes:
        base = col
        # Pass 1: per-position |x| max across the group's channels (VPU elementwise max).
        block_max = jnp.abs(x_ref[:, base:base + hw].astype(jnp.float32))
        for k in range(1, gsz):
            lo = base + k * hw
            block_max = jnp.maximum(
                block_max, jnp.abs(x_ref[:, lo:lo + hw].astype(jnp.float32)))
        scale, inv_scale = _shared_scales(block_max, min_e=min_e, max_e=max_e, mts=mts)
        # Pass 2: quantize each chunk with the shared scale (re-read VMEM instead of
        # keeping all chunks live in vregs -> no spills for big tiles).
        for k in range(gsz):
            lo = base + k * hw
            xc = x_ref[:, lo:lo + hw].astype(jnp.float32)
            q = jnp.clip(jnp.round(xc * scale), min_m, max_m) * inv_scale
            o_ref[:, lo:lo + hw] = q.astype(o_ref.dtype)
        col += gsz * hw


def _bfp_sublane_kernel(x_ref, o_ref, *, group_sizes,
                        min_e, max_e, mts, min_m, max_m):
    """x_ref/o_ref: (tb, C_rows, hw_t); channel groups are consecutive sublane rows."""
    row = 0
    for gsz in group_sizes:
        xg = x_ref[:, row:row + gsz, :].astype(jnp.float32)
        block_max = jnp.max(jnp.abs(xg), axis=1, keepdims=True)
        scale, inv_scale = _shared_scales(block_max, min_e=min_e, max_e=max_e, mts=mts)
        q = jnp.clip(jnp.round(xg * scale), min_m, max_m) * inv_scale
        o_ref[:, row:row + gsz, :] = q.astype(o_ref.dtype)
        row += gsz


def _vmem_limit(tile_bytes):
    # in + out, double-buffered (~4x tile) plus headroom; never below the 16 MiB default.
    return int(min(96 << 20, max(16 << 20, 5 * tile_bytes + (2 << 20))))


def _bfp_lane_call(xv, *, group_sizes, hw, qp):
    b2, lanes = xv.shape
    itemsize = jnp.dtype(xv.dtype).itemsize
    subt = _sublane_tile(xv.dtype)
    row_bytes = lanes * itemsize

    tb = max(1, _TARGET_TILE_BYTES // row_bytes)
    if _num_tensorcores() >= 2 and b2 >= 2:
        tb = min(tb, pl.cdiv(b2, 2))   # keep >= 2 grid steps for cross-core sharding
    tb = min(tb, b2)
    if tb < b2:
        # Second-minor block dim must be a multiple of the sublane tile (or the full dim).
        tb = max(subt, (tb // subt) * subt)
        if tb >= b2:
            tb = b2
    grid = pl.cdiv(b2, tb)

    kernel = functools.partial(_bfp_lane_kernel, group_sizes=group_sizes, hw=hw, **qp)
    return pl.pallas_call(
        kernel,
        out_shape=jax.ShapeDtypeStruct((b2, lanes), xv.dtype),
        grid=(grid,),
        in_specs=[pl.BlockSpec((tb, lanes), lambda i: (i, 0))],
        out_specs=pl.BlockSpec((tb, lanes), lambda i: (i, 0)),
        compiler_params=pltpu.CompilerParams(
            dimension_semantics=("parallel",),
            vmem_limit_bytes=_vmem_limit(tb * row_bytes),
        ),
    )(xv)


def _bfp_sublane_call(xv, *, group_sizes, qp):
    b2, crows, hw = xv.shape
    itemsize = jnp.dtype(xv.dtype).itemsize
    subt = _sublane_tile(xv.dtype)
    rows_pad = _round_up(crows, subt)

    # Lane-axis tiling (second grid axis) when hw is 128-aligned and a full slab is big.
    full_slab_bytes = rows_pad * _round_up(hw, _LANE) * itemsize
    if hw % _LANE == 0 and full_slab_bytes > _TARGET_TILE_BYTES:
        thw = (_TARGET_TILE_BYTES // (rows_pad * itemsize)) // _LANE * _LANE
        thw = min(hw, max(_LANE, thw))
    else:
        thw = hw
    row_bytes = rows_pad * _round_up(thw, _LANE) * itemsize

    tb = max(1, _TARGET_TILE_BYTES // row_bytes)
    if _num_tensorcores() >= 2 and b2 >= 2:
        tb = min(tb, pl.cdiv(b2, 2))
    tb = min(tb, b2)
    grid = (pl.cdiv(b2, tb), pl.cdiv(hw, thw))

    kernel = functools.partial(_bfp_sublane_kernel, group_sizes=group_sizes, **qp)
    return pl.pallas_call(
        kernel,
        out_shape=jax.ShapeDtypeStruct((b2, crows, hw), xv.dtype),
        grid=grid,
        in_specs=[pl.BlockSpec((tb, crows, thw), lambda i, j: (i, 0, j))],
        out_specs=pl.BlockSpec((tb, crows, thw), lambda i, j: (i, 0, j)),
        compiler_params=pltpu.CompilerParams(
            dimension_semantics=("parallel", "parallel"),
            vmem_limit_bytes=_vmem_limit(tb * row_bytes),
        ),
    )(xv)


def bfp_activation_legacy(x, *, mantissa, exponent, blk):
    """JAX/Pallas equivalent of BFPActivationLegacy.forward on an NCHW tensor."""
    if mantissa is None:
        return x

    n, c, h, w = x.shape
    hw = h * w
    n_full, rem = divmod(c, blk)
    qp = _qparams(mantissa, exponent)
    itemsize = jnp.dtype(x.dtype).itemsize

    if rem != 0 and (n_full + 1) > _MAX_UNROLL_GROUPS:
        # Too many channel groups to unroll statically in one kernel body: zero-pad once
        # (zeros never raise the shared exponent, exactly as in the reference) and reuse
        # the aligned path.  Rare shapes only; costs one extra HBM pass.
        xp = jnp.pad(x, ((0, 0), (0, blk - rem), (0, 0), (0, 0)))
        return bfp_activation_legacy(xp, mantissa=mantissa, exponent=exponent, blk=blk)[:, :c]

    if hw % _LANE == 0:
        # Dense lane-chunk layout (no sublane padding); free contiguous reshapes.
        if rem == 0:
            if blk * hw * itemsize <= _MAX_ROW_TILE_BYTES:
                xv = x.reshape(n * n_full, blk * hw)
                out = _bfp_lane_call(xv, group_sizes=(blk,), hw=hw, qp=qp)
                return out.reshape(n, c, h, w)
        else:
            if c * hw * itemsize <= _MAX_ROW_TILE_BYTES:
                xv = x.reshape(n, c * hw)
                out = _bfp_lane_call(
                    xv, group_sizes=(blk,) * n_full + (rem,), hw=hw, qp=qp)
                return out.reshape(n, c, h, w)
        # else: fall through to the sublane layout, which can tile the lane axis.

    # Sublane layout: channel groups sit on the sublane axis.  blk < 8 costs padded
    # sublanes in-register, but HBM traffic stays one dense read + one dense write.
    if rem == 0:
        xv = x.reshape(n * n_full, blk, hw)
        out = _bfp_sublane_call(xv, group_sizes=(blk,), qp=qp)
    else:
        xv = x.reshape(n, c, hw)
        out = _bfp_sublane_call(xv, group_sizes=(blk,) * n_full + (rem,), qp=qp)
    return out.reshape(n, c, h, w)


def _reference_bfp(x, *, mantissa, exponent, blk):
    """Plain-JAX reference mirroring the PyTorch semantics (pad / per-element log2 / divide)."""
    n, c, h, w = x.shape
    n_blocks = math.ceil(c / blk)
    pad_val = n_blocks * blk - c
    if pad_val:
        x = jnp.pad(x, ((0, 0), (0, pad_val), (0, 0), (0, 0)))
    min_e = -(2 ** (exponent - 1))
    max_e = 2 ** (exponent - 1) - 1
    min_m = -(2 ** mantissa) + 1
    max_m = 2 ** mantissa - 1
    xr = x.reshape(n * n_blocks, blk, h, w)
    value_log = jnp.clip(jnp.log2(jnp.abs(xr)), min_e, max_e)
    max_log = jnp.max(jnp.floor(value_log), axis=1, keepdims=True)
    scale = jnp.exp2(mantissa - max_log - 1.0)
    q = jnp.clip(jnp.round(xr * scale), min_m, max_m) / scale
    return q.reshape(n, n_blocks * blk, h, w)[:, :c, :, :]


if __name__ == "__main__":
    # Module hyperparameters (deterministic, set in-script).
    MANTISSA = 3
    EXPONENT = 8
    BLK = 4

    key = jax.random.PRNGKey(0)
    k1, k2, k3, k4 = jax.random.split(key, 4)

    def _check(xx, name):
        out = jax.block_until_ready(
            bfp_activation_legacy(xx, mantissa=MANTISSA, exponent=EXPONENT, blk=BLK))
        ref = _reference_bfp(xx, mantissa=MANTISSA, exponent=EXPONENT, blk=BLK)
        assert out.shape == xx.shape and out.dtype == xx.dtype, f"{name}: shape/dtype"
        assert jnp.allclose(out, ref, atol=1e-6, rtol=1e-6), f"{name}: mismatch vs reference"

    # Lane-chunk path (H*W % 128 == 0): aligned and ragged channel counts.
    _check(jax.random.normal(k1, (2, 8, 16, 16), jnp.float32) * 3.0, "lane/aligned")
    _check(jax.random.normal(k2, (2, 6, 16, 16), jnp.float32) * 3.0, "lane/ragged")

    # Sublane fallback path (H*W % 128 != 0): aligned and ragged channel counts.
    _check(jax.random.normal(k3, (2, 8, 12, 12), jnp.float32) * 3.0, "sublane/aligned")
    _check(jax.random.normal(k4, (2, 6, 12, 12), jnp.float32) * 3.0, "sublane/ragged")

    print("KERNEL_OK")
</pallas_src>

<mosaic_0001>
module attributes {stable_mosaic.version = 11 : i64} {
  func.func @_bfp_lane_kernel(%arg0: i32, %arg1: memref<4x1024xf32, #tpu.memory_space<vmem>>, %arg2: memref<4x1024xf32, #tpu.memory_space<vmem>>) attributes {dimension_semantics = [#tpu.dimension_semantics<parallel>], iteration_bounds = array<i64: 1>, scalar_prefetch = 0 : i64, scratch_operands = 0 : i64, tpu.core_type = #tpu.core_type<tc>, window_params = [{transform_indices = @transform_0, window_bounds = array<i64: 4, 1024>}, {transform_indices = @transform_1, window_bounds = array<i64: 4, 1024>}]} {
    %c0 = arith.constant 0 : index
    %c0_0 = arith.constant 0 : index
    %0 = vector.load %arg1[%c0, %c0_0] : memref<4x1024xf32, #tpu.memory_space<vmem>>, vector<4x256xf32>
    %1 = math.absf %0 : vector<4x256xf32>
    %c0_1 = arith.constant 0 : index
    %c256 = arith.constant 256 : index
    %2 = vector.load %arg1[%c0_1, %c256] : memref<4x1024xf32, #tpu.memory_space<vmem>>, vector<4x256xf32>
    %3 = math.absf %2 : vector<4x256xf32>
    %4 = arith.maximumf %1, %3 : vector<4x256xf32>
    %c0_2 = arith.constant 0 : index
    %c512 = arith.constant 512 : index
    %5 = vector.load %arg1[%c0_2, %c512] : memref<4x1024xf32, #tpu.memory_space<vmem>>, vector<4x256xf32>
    %6 = math.absf %5 : vector<4x256xf32>
    %7 = arith.maximumf %4, %6 : vector<4x256xf32>
    %c0_3 = arith.constant 0 : index
    %c768 = arith.constant 768 : index
    %8 = vector.load %arg1[%c0_3, %c768] : memref<4x1024xf32, #tpu.memory_space<vmem>>, vector<4x256xf32>
    %9 = math.absf %8 : vector<4x256xf32>
    %10 = arith.maximumf %7, %9 : vector<4x256xf32>
    %11 = math.log %10 : vector<4x256xf32>
    %cst = arith.constant 2.000000e+00 : f32
    %12 = math.log %cst : f32
    %13 = vector.broadcast %12 : f32 to vector<4x256xf32>
    %14 = arith.divf %11, %13 : vector<4x256xf32>
    %cst_4 = arith.constant -1.280000e+02 : f32
    %cst_5 = arith.constant 1.270000e+02 : f32
    %15 = vector.broadcast %cst_4 : f32 to vector<4x256xf32>
    %16 = arith.maximumf %15, %14 : vector<4x256xf32>
    %17 = vector.broadcast %cst_5 : f32 to vector<4x256xf32>
    %18 = arith.minimumf %17, %16 : vector<4x256xf32>
    %19 = math.floor %18 : vector<4x256xf32>
    %cst_6 = arith.constant 2.000000e+00 : f32
    %20 = vector.broadcast %cst_6 : f32 to vector<4x256xf32>
    %21 = arith.subf %20, %19 : vector<4x256xf32>
    %22 = math.exp2 %21 : vector<4x256xf32>
    %cst_7 = arith.constant 1.000000e+00 : f32
    %23 = vector.broadcast %cst_7 : f32 to vector<4x256xf32>
    %24 = arith.addf %19, %23 : vector<4x256xf32>
    %cst_8 = arith.constant 3.000000e+00 : f32
    %25 = vector.broadcast %cst_8 : f32 to vector<4x256xf32>
    %26 = arith.subf %24, %25 : vector<4x256xf32>
    %27 = math.exp2 %26 : vector<4x256xf32>
    %c0_9 = arith.constant 0 : index
    %c0_10 = arith.constant 0 : index
    %28 = vector.load %arg1[%c0_9, %c0_10] : memref<4x1024xf32, #tpu.memory_space<vmem>>, vector<4x256xf32>
    %29 = arith.mulf %28, %22 : vector<4x256xf32>
    %30 = math.roundeven %29 : vector<4x256xf32>
    %cst_11 = arith.constant -7.000000e+00 : f32
    %cst_12 = arith.constant 7.000000e+00 : f32
    %31 = vector.broadcast %cst_11 : f32 to vector<4x256xf32>
    %32 = arith.maximumf %31, %30 : vector<4x256xf32>
    %33 = vector.broadcast %cst_12 : f32 to vector<4x256xf32>
    %34 = arith.minimumf %33, %32 : vector<4x256xf32>
    %35 = arith.mulf %34, %27 : vector<4x256xf32>
    %c0_13 = arith.constant 0 : index
    %c0_14 = arith.constant 0 : index
    %36 = vector.load %arg2[%c0_13, %c0_14] : memref<4x1024xf32, #tpu.memory_space<vmem>>, vector<4x256xf32>
    tpu.vector_store %arg2[%c0_13, %c0_14], %35 {strides = array<i32>} : memref<4x1024xf32, #tpu.memory_space<vmem>>, vector<4x256xf32>,
    %c0_15 = arith.constant 0 : index
    %c256_16 = arith.constant 256 : index
    %37 = vector.load %arg1[%c0_15, %c256_16] : memref<4x1024xf32, #tpu.memory_space<vmem>>, vector<4x256xf32>
    %38 = arith.mulf %37, %22 : vector<4x256xf32>
    %39 = math.roundeven %38 : vector<4x256xf32>
    %cst_17 = arith.constant -7.000000e+00 : f32
    %cst_18 = arith.constant 7.000000e+00 : f32
    %40 = vector.broadcast %cst_17 : f32 to vector<4x256xf32>
    %41 = arith.maximumf %40, %39 : vector<4x256xf32>
    %42 = vector.broadcast %cst_18 : f32 to vector<4x256xf32>
    %43 = arith.minimumf %42, %41 : vector<4x256xf32>
    %44 = arith.mulf %43, %27 : vector<4x256xf32>
    %c0_19 = arith.constant 0 : index
    %c256_20 = arith.constant 256 : index
    %45 = vector.load %arg2[%c0_19, %c256_20] : memref<4x1024xf32, #tpu.memory_space<vmem>>, vector<4x256xf32>
    tpu.vector_store %arg2[%c0_19, %c256_20], %44 {strides = array<i32>} : memref<4x1024xf32, #tpu.memory_space<vmem>>, vector<4x256xf32>,
    %c0_21 = arith.constant 0 : index
    %c512_22 = arith.constant 512 : index
    %46 = vector.load %arg1[%c0_21, %c512_22] : memref<4x1024xf32, #tpu.memory_space<vmem>>, vector<4x256xf32>
    %47 = arith.mulf %46, %22 : vector<4x256xf32>
    %48 = math.roundeven %47 : vector<4x256xf32>
    %cst_23 = arith.constant -7.000000e+00 : f32
    %cst_24 = arith.constant 7.000000e+00 : f32
    %49 = vector.broadcast %cst_23 : f32 to vector<4x256xf32>
    %50 = arith.maximumf %49, %48 : vector<4x256xf32>
    %51 = vector.broadcast %cst_24 : f32 to vector<4x256xf32>
    %52 = arith.minimumf %51, %50 : vector<4x256xf32>
    %53 = arith.mulf %52, %27 : vector<4x256xf32>
    %c0_25 = arith.constant 0 : index
    %c512_26 = arith.constant 512 : index
    %54 = vector.load %arg2[%c0_25, %c512_26] : memref<4x1024xf32, #tpu.memory_space<vmem>>, vector<4x256xf32>
    tpu.vector_store %arg2[%c0_25, %c512_26], %53 {strides = array<i32>} : memref<4x1024xf32, #tpu.memory_space<vmem>>, vector<4x256xf32>,
    %c0_27 = arith.constant 0 : index
    %c768_28 = arith.constant 768 : index
    %55 = vector.load %arg1[%c0_27, %c768_28] : memref<4x1024xf32, #tpu.memory_space<vmem>>, vector<4x256xf32>
    %56 = arith.mulf %55, %22 : vector<4x256xf32>
    %57 = math.roundeven %56 : vector<4x256xf32>
    %cst_29 = arith.constant -7.000000e+00 : f32
    %cst_30 = arith.constant 7.000000e+00 : f32
    %58 = vector.broadcast %cst_29 : f32 to vector<4x256xf32>
    %59 = arith.maximumf %58, %57 : vector<4x256xf32>
    %60 = vector.broadcast %cst_30 : f32 to vector<4x256xf32>
    %61 = arith.minimumf %60, %59 : vector<4x256xf32>
    %62 = arith.mulf %61, %27 : vector<4x256xf32>
    %c0_31 = arith.constant 0 : index
    %c768_32 = arith.constant 768 : index
    %63 = vector.load %arg2[%c0_31, %c768_32] : memref<4x1024xf32, #tpu.memory_space<vmem>>, vector<4x256xf32>
    tpu.vector_store %arg2[%c0_31, %c768_32], %62 {strides = array<i32>} : memref<4x1024xf32, #tpu.memory_space<vmem>>, vector<4x256xf32>,
    return
  }
  func.func @transform_0(%arg0: i32) -> (i32, i32) {
    %c0_i32 = arith.constant 0 : i32
    %c0_i32_0 = arith.constant 0 : i32
    return %arg0, %c0_i32 : i32, i32
  }
  func.func @transform_1(%arg0: i32) -> (i32, i32) {
    %c0_i32 = arith.constant 0 : i32
    %c0_i32_0 = arith.constant 0 : i32
    return %arg0, %c0_i32 : i32, i32
  }
}

</mosaic_0001>

<llo_original>
// kernel: tpu_custom_call.1
$region0: #{tpu_custom_call.1}
  #allocation0 [shape = 'u32[]', space=smem, size = 0x4, offset = 0x4, fixed_abs, tag = 'smem constant byte address 0x4 - core index']
  #allocation1 [shape = 'u32[144,128]{1,0:T(1,128)}', space=vmem, size = 0x12000, scoped, tag = 'internal scratch']
  %s0 = inlined_call_operand.hbm [shape: f32[4,1024], index: 0, kind: input, shape index: {}]
  %s1 = inlined_call_operand.hbm [shape: f32[4,1024], index: 1, kind: output, shape index: {}]
  %s2 = sld [smem:[#allocation0]]
  $region18: #{tpu_custom_call.1} parent=0
    _
  %s4 = ssub.s32 1, %s2
  %s5 = scalar_select 0, %s4, %s2
  $region1: #{tpu_custom_call.1} parent=0
    #allocation2 [shape = 'u8[16384]{0}', space=vmem, size = 0x4000, scoped, tag = 'input window, operand 0, single buffered']
    #allocation3 [shape = 's32[1]{0}', space=sflag, size = 0x4, scoped, tag = 'scoped memory for tpu_custom_call.1']
    #allocation4 [shape = 's32[1]{0}', space=sflag, size = 0x4, scoped, tag = 'scoped memory for tpu_custom_call.1']
    #allocation5 [shape = 'u8[16384]{0}', space=vmem, size = 0x4000, scoped, tag = 'output window, operand 0, single buffered']
    %6 = vsyncpa [#allocation3], 0
    %7 = vsyncpa [#allocation4], 0
    // Predicated region
    $region2: #{tpu_custom_call.1} parent=1 // pred_check
      _
    $region3: #{tpu_custom_call.1} parent=1 // pred_check_branch
      %9 = sbr.rel (0) target = $region5
    $region4: #{tpu_custom_call.1} parent=1 // pred_region
      %s11 = ssub.s32 512, 512
      %12 = vsyncadd [#allocation3], %s11
      %s14 = sshll.u32 [#allocation2], 4
      %s15 = int_to_ptr.vmem [resolvable:$true] %s14
      %17 = dma.hbm_to_vmem [thread:$0]  %s0, 512, %s15, [#allocation3]
    $region5: #{tpu_custom_call.1} parent=1 // pred_fallthru
      _
    // Predicated region
    $region6: #{tpu_custom_call.1} parent=1 // pred_check
      _
    $region7: #{tpu_custom_call.1} parent=1 // pred_check_branch
      %19 = sbr.rel (0) target = $region9
    $region8: #{tpu_custom_call.1} parent=1 // pred_region
      %20 = dma.done [#allocation3], 512
    $region9: #{tpu_custom_call.1} parent=1 // pred_fallthru
      _
    %v21 = vld [vmem:[#allocation2] sm:$0xff]
    %v22 = vand.u32 2147483647, %v21
    %v23 = vld [vmem:[#allocation2 + $0x8] sm:$0xff]
    %v24 = vand.u32 2147483647, %v23
    %v25 = vmax.f32 %v22, %v24
    %v26 = vld [vmem:[#allocation2 + $0x10] sm:$0xff]
    %v27 = vand.u32 2147483647, %v26
    %v28 = vmax.f32 %v25, %v27
    %v29 = vld [vmem:[#allocation2 + $0x18] sm:$0xff]
    %v30 = vand.u32 2147483647, %v29
    %v31 = vmax.f32 %v28, %v30
    %v32 = vlog2.pop %v31
    %v33 = vmul.f32 %v32, 0.6931472
    %v34 = vrcp.pop 0.6931472
    %v35 = vmul.f32 %v33, %v34
    %v36 = vmax.f32 %v35, -128.0
    %v37 = vmin.f32 %v36, 127.0
    %v38 = vfloor.f32 %v37
    %v39 = vsub.f32 2.0, %v38
    %v40 = vpow.pop %v39
    %v41 = vadd.f32 %v38, 1.0
    %v42 = vsub.f32 %v41, 3.0
    %v43 = vpow.pop %v42
    %v44 = vmul.f32 %v21, %v40
    %v45 = vround.ne.pseudo %v44
    %v46 = vmax.f32 %v45, -7.0
    %v47 = vmin.f32 %v46, 7.0
    %v48 = vmul.f32 %v47, %v43
    %49 = vst [vmem:[#allocation5] sm:$0xff] %v48
    %v50 = vld [vmem:[#allocation2 + $0x8] sm:$0xff]
    %v51 = vmul.f32 %v50, %v40
    %v52 = vround.ne.pseudo %v51
    %v53 = vmax.f32 %v52, -7.0
    %v54 = vmin.f32 %v53, 7.0
    %v55 = vmul.f32 %v54, %v43
    %56 = vst [vmem:[#allocation5 + $0x8] sm:$0xff] %v55
    %v57 = vld [vmem:[#allocation2 + $0x10] sm:$0xff]
    %v58 = vmul.f32 %v57, %v40
    %v59 = vround.ne.pseudo %v58
    %v60 = vmax.f32 %v59, -7.0
    %v61 = vmin.f32 %v60, 7.0
    %v62 = vmul.f32 %v61, %v43
    %63 = vst [vmem:[#allocation5 + $0x10] sm:$0xff] %v62
    %v64 = vld [vmem:[#allocation2 + $0x18] sm:$0xff]
    %v65 = vmul.f32 %v64, %v40
    %v66 = vround.ne.pseudo %v65
    %v67 = vmax.f32 %v66, -7.0
    %v68 = vmin.f32 %v67, 7.0
    %v69 = vmul.f32 %v68, %v43
    %70 = vst [vmem:[#allocation5 + $0x18] sm:$0xff] %v69
    // Predicated region
    $region10: #{tpu_custom_call.1} parent=1 // pred_check
      _
    $region11: #{tpu_custom_call.1} parent=1 // pred_check_branch
      %72 = sbr.rel (0) target = $region13
    $region12: #{tpu_custom_call.1} parent=1 // pred_region
      %s74 = ssub.s32 512, 512
      %75 = vsyncadd [#allocation4], %s74
      %s77 = sshll.u32 [#allocation5], 4
      %s78 = int_to_ptr.vmem [resolvable:$true] %s77
      %80 = dma.vmem_to_hbm [thread:$0]  %s78, 512, %s1, [#allocation4]
    $region13: #{tpu_custom_call.1} parent=1 // pred_fallthru
      _
    // Predicated region
    $region14: #{tpu_custom_call.1} parent=1 // pred_check
      _
    $region15: #{tpu_custom_call.1} parent=1 // pred_check_branch
      %82 = sbr.rel (0) target = $region17
    $region16: #{tpu_custom_call.1} parent=1 // pred_region
      %83 = dma.done [#allocation4], 512
    $region17: #{tpu_custom_call.1} parent=1 // pred_fallthru
      _
    %84 = vsyncpa [#allocation3], 1
    %85 = vsyncpa [#allocation4], 1

</llo_original>
